<compile_context>
chip_gen: v6e
topology: v6e:2x2x1
jax: 0.10.0
libtpu: 0.0.40
codegen_flags: <defaults>
</compile_context>

<pallas_src>
import functools

import jax
import jax.numpy as jnp
from jax.experimental import pallas as pl
from jax.experimental.pallas import tpu as pltpu

LANES = 128      # lane width; hidden is zero-padded to this
H_P = 128        # padded hidden width
OUT_P = 128      # padded output width (small-B lane-dense path only)
BIAS_ROWS = 8    # each bias padded to a full sublane tile in the packed buffer

TILE_B_MAX = 4096   # max batch tile (mem-bound regime; VMEM-safe on v7x)
SMALL_B = 1024      # below this: single tile, lane-dense 128-wide output


def _round_up(n, m):
    return (n + m - 1) // m * m


def _fcnn2_kernel(x_ref, p_ref, o_ref, *, in_p, h_p, bias_rows, out_w, use_bf16):
    # Static row offsets inside the packed parameter buffer (all tile-aligned).
    r_w1 = 0
    r_b1 = r_w1 + in_p
    r_w2 = r_b1 + bias_rows
    r_b2 = r_w2 + h_p
    r_w3 = r_b2 + bias_rows
    r_b3 = r_w3 + h_p

    x = x_ref[...]                              # (TILE_B, in_p)  f32
    w1 = p_ref[r_w1:r_w1 + in_p, :]             # (in_p, 128)
    b1 = p_ref[r_b1:r_b1 + 1, :]                # (1, 128) — single broadcast
    w2 = p_ref[r_w2:r_w2 + h_p, :]              # (128, 128)
    b2 = p_ref[r_b2:r_b2 + 1, :]
    w3 = p_ref[r_w3:r_w3 + h_p, :]              # (128, 128)
    b3 = p_ref[r_b3:r_b3 + 1, :]

    mm_dtype = jnp.bfloat16 if use_bf16 else jnp.float32

    def dot(a, w):
        # MXU matmul with f32 accumulation; optional bf16 inputs restore full
        # MXU rate on v6e/v7x once the kernel is compute-ceilinged.
        return jnp.dot(a.astype(mm_dtype), w.astype(mm_dtype),
                       preferred_element_type=jnp.float32)

    # Sigmoid (exp) runs on the EUP in f32 (safe on v5e, free slot everywhere).
    # Padded hidden lanes: sigmoid(0)=0.5 is annihilated by the zeroed rows of
    # w2/w3, so the math is identical to the reference.
    h1 = jax.nn.sigmoid(dot(x, w1) + b1)
    h2 = jax.nn.sigmoid(dot(h1, w2) + b2)
    out = dot(h2, w3) + b3                      # (TILE_B, 128) f32

    # Large-B path stores only the real output lanes (out_w = output_size),
    # cutting HBM writeback ~16x; small-B path keeps a lane-dense 128 store.
    o_ref[...] = out[:, :out_w].astype(o_ref.dtype)


def pack_params(params, input_size, output_size):
    """Pack (w1,b1,w2,b2,w3,b3) — weights stored [in, out] — into one
    lane-aligned (ROWS, 128) f32 buffer with zero padding."""
    w1, b1, w2, b2, w3, b3 = params
    hidden = w1.shape[1]
    assert hidden <= LANES and output_size <= LANES and w2.shape == (hidden, hidden)

    in_p = _round_up(input_size, 8)
    rows = in_p + BIAS_ROWS + H_P + BIAS_ROWS + H_P + BIAS_ROWS
    buf = jnp.zeros((rows, LANES), jnp.float32)

    r_w1 = 0
    r_b1 = r_w1 + in_p
    r_w2 = r_b1 + BIAS_ROWS
    r_b2 = r_w2 + H_P
    r_w3 = r_b2 + BIAS_ROWS
    r_b3 = r_w3 + H_P

    buf = buf.at[r_w1:r_w1 + input_size, :hidden].set(w1)
    buf = buf.at[r_b1, :hidden].set(b1.reshape(-1))
    # Padded rows of w2/w3 stay zero so sigmoid(0)=0.5 on padded hidden lanes
    # contributes nothing to the next layer.
    buf = buf.at[r_w2:r_w2 + hidden, :hidden].set(w2)
    buf = buf.at[r_b2, :hidden].set(b2.reshape(-1))
    buf = buf.at[r_w3:r_w3 + hidden, :output_size].set(w3)
    buf = buf.at[r_b3, :output_size].set(b3.reshape(-1))
    return buf


@functools.partial(jax.jit,
                   static_argnames=("input_size", "output_size", "use_bf16"))
def fcnn2_forward(x, packed, *, input_size, output_size, use_bf16=False):
    B = x.shape[0]
    in_p = _round_up(input_size, 8)

    # Batch tiling:
    #  * small B  -> single tile (overhead-bound; keep lane-dense 128 output)
    #  * larger B -> >= 2 grid steps (v7x megacore) with tiles up to 4096 rows
    if B <= SMALL_B:
        tile_b = max(8, _round_up(B, 8))
        out_w = OUT_P
    else:
        tile_b = min(TILE_B_MAX, _round_up(-(-B // 2), 8))
        out_w = output_size
    b_pad = _round_up(B, tile_b)
    nb = b_pad // tile_b

    # x kept at in_p lanes (NOT padded to 128) — dominant HBM read stream.
    x_p = jnp.zeros((b_pad, in_p), jnp.float32).at[:B, :input_size].set(x)
    rows = packed.shape[0]

    kernel = functools.partial(
        _fcnn2_kernel, in_p=in_p, h_p=H_P, bias_rows=BIAS_ROWS,
        out_w=out_w, use_bf16=use_bf16)

    flops = 2 * b_pad * (in_p * H_P + H_P * H_P + H_P * H_P)
    transcendentals = 2 * b_pad * H_P
    bytes_accessed = 4 * (x_p.size + packed.size + b_pad * out_w)

    out_padded = pl.pallas_call(
        kernel,
        out_shape=jax.ShapeDtypeStruct((b_pad, out_w), jnp.float32),
        grid=(nb,),
        in_specs=[
            pl.BlockSpec((tile_b, in_p), lambda i: (i, 0)),
            # Constant block index -> packed params stay VMEM-resident
            # across all batch tiles (no re-DMA per step).
            pl.BlockSpec((rows, LANES), lambda i: (0, 0)),
        ],
        out_specs=pl.BlockSpec((tile_b, out_w), lambda i: (i, 0)),
        compiler_params=pltpu.CompilerParams(
            dimension_semantics=("parallel",)),
        cost_estimate=pl.CostEstimate(
            flops=flops,
            transcendentals=transcendentals,
            bytes_accessed=bytes_accessed),
    )(x_p, packed)

    return out_padded[:B, :output_size]


def init_params(key, input_size, output_size, hidden=20):
    """Deterministic init mimicking PyTorch Linear default (uniform ±1/sqrt(fan_in)).
    Weights stored as [in_features, out_features] (transpose of PyTorch's [out, in])."""
    def linear(k, fan_in, fan_out):
        kw, kb = jax.random.split(k)
        bound = 1.0 / jnp.sqrt(fan_in)
        w = jax.random.uniform(kw, (fan_in, fan_out), jnp.float32, -bound, bound)
        b = jax.random.uniform(kb, (1, fan_out), jnp.float32, -bound, bound)
        return w, b

    k1, k2, k3 = jax.random.split(key, 3)
    w1, b1 = linear(k1, input_size, hidden)
    w2, b2 = linear(k2, hidden, hidden)
    w3, b3 = linear(k3, hidden, output_size)
    return (w1, b1, w2, b2, w3, b3)


def _reference(x, params):
    w1, b1, w2, b2, w3, b3 = params
    h = jax.nn.sigmoid(x @ w1 + b1)
    h = jax.nn.sigmoid(h @ w2 + b2)
    return h @ w3 + b3


if __name__ == "__main__":
    input_size = 32
    output_size = 8

    key = jax.random.PRNGKey(0)
    kx, kp, kx2 = jax.random.split(key, 3)
    params = init_params(kp, input_size, output_size)
    packed = pack_params(params, input_size, output_size)

    # Small-B path (single tile, lane-dense 128-wide output).
    batch = 8
    x = jax.random.normal(kx, (batch, input_size), dtype=jnp.float32)
    out = fcnn2_forward(x, packed, input_size=input_size, output_size=output_size)
    out = jax.block_until_ready(out)
    ref = _reference(x, params)
    assert out.shape == (batch, output_size)
    assert jnp.allclose(out, ref, atol=1e-5, rtol=1e-5)

    # Larger-B path (2 grid steps, trimmed output_size-wide writeback,
    # batch not a multiple of the tile -> exercises padding).
    batch2 = 2500
    x2 = jax.random.normal(kx2, (batch2, input_size), dtype=jnp.float32)
    out2 = fcnn2_forward(x2, packed, input_size=input_size, output_size=output_size)
    out2 = jax.block_until_ready(out2)
    ref2 = _reference(x2, params)
    assert out2.shape == (batch2, output_size)
    assert jnp.allclose(out2, ref2, atol=1e-5, rtol=1e-5)

    print("KERNEL_OK")
</pallas_src>

<mosaic_0001>
module attributes {stable_mosaic.version = 11 : i64} {
  func.func @_fcnn2_kernel(%arg0: i32, %arg1: memref<8x32xf32, #tpu.memory_space<vmem>>, %arg2: memref<312x128xf32, #tpu.memory_space<vmem>>, %arg3: memref<8x128xf32, #tpu.memory_space<vmem>>) attributes {dimension_semantics = [#tpu.dimension_semantics<parallel>], iteration_bounds = array<i64: 1>, scalar_prefetch = 0 : i64, scratch_operands = 0 : i64, tpu.core_type = #tpu.core_type<tc>, window_params = [{transform_indices = @transform_0, window_bounds = array<i64: 8, 32>}, {pipeline_mode = #tpu.pipeline_mode<synchronous>, transform_indices = @transform_1, window_bounds = array<i64: 312, 128>}, {transform_indices = @transform_2, window_bounds = array<i64: 8, 128>}]} {
    %c0 = arith.constant 0 : index
    %c0_0 = arith.constant 0 : index
    %0 = vector.load %arg1[%c0, %c0_0] : memref<8x32xf32, #tpu.memory_space<vmem>>, vector<8x32xf32>
    %c0_1 = arith.constant 0 : index
    %c0_2 = arith.constant 0 : index
    %1 = vector.load %arg2[%c0_1, %c0_2] : memref<312x128xf32, #tpu.memory_space<vmem>>, vector<32x128xf32>
    %c32 = arith.constant 32 : index
    %c0_3 = arith.constant 0 : index
    %2 = vector.load %arg2[%c32, %c0_3] : memref<312x128xf32, #tpu.memory_space<vmem>>, vector<1x128xf32>
    %c40 = arith.constant 40 : index
    %c0_4 = arith.constant 0 : index
    %3 = vector.load %arg2[%c40, %c0_4] : memref<312x128xf32, #tpu.memory_space<vmem>>, vector<128x128xf32>
    %c168 = arith.constant 168 : index
    %c0_5 = arith.constant 0 : index
    %4 = vector.load %arg2[%c168, %c0_5] : memref<312x128xf32, #tpu.memory_space<vmem>>, vector<1x128xf32>
    %c176 = arith.constant 176 : index
    %c0_6 = arith.constant 0 : index
    %5 = vector.load %arg2[%c176, %c0_6] : memref<312x128xf32, #tpu.memory_space<vmem>>, vector<128x128xf32>
    %c304 = arith.constant 304 : index
    %c0_7 = arith.constant 0 : index
    %6 = vector.load %arg2[%c304, %c0_7] : memref<312x128xf32, #tpu.memory_space<vmem>>, vector<1x128xf32>
    %cst = arith.constant dense<0.000000e+00> : vector<8x128xf32>
    %7 = tpu.matmul %0, %1, %cst {dimension_numbers = #tpu.dot_dimension_numbers<[1], [0], [0], [1], [0, 0, 1, 1], [], []>} : vector<8x32xf32>, vector<32x128xf32>, vector<8x128xf32> -> vector<8x128xf32>
    %8 = vector.broadcast %2 : vector<1x128xf32> to vector<8x128xf32>
    %9 = arith.addf %7, %8 : vector<8x128xf32>
    %10 = arith.negf %9 : vector<8x128xf32>
    %11 = math.exp %10 : vector<8x128xf32>
    %cst_8 = arith.constant 1.000000e+00 : f32
    %12 = vector.broadcast %cst_8 : f32 to vector<8x128xf32>
    %13 = arith.addf %12, %11 : vector<8x128xf32>
    %14 = arith.divf %12, %13 : vector<8x128xf32>
    %cst_9 = arith.constant dense<0.000000e+00> : vector<8x128xf32>
    %15 = tpu.matmul %14, %3, %cst_9 {dimension_numbers = #tpu.dot_dimension_numbers<[1], [0], [0], [1], [0, 0, 1, 1], [], []>} : vector<8x128xf32>, vector<128x128xf32>, vector<8x128xf32> -> vector<8x128xf32>
    %16 = vector.broadcast %4 : vector<1x128xf32> to vector<8x128xf32>
    %17 = arith.addf %15, %16 : vector<8x128xf32>
    %18 = arith.negf %17 : vector<8x128xf32>
    %19 = math.exp %18 : vector<8x128xf32>
    %cst_10 = arith.constant 1.000000e+00 : f32
    %20 = vector.broadcast %cst_10 : f32 to vector<8x128xf32>
    %21 = arith.addf %20, %19 : vector<8x128xf32>
    %22 = arith.divf %20, %21 : vector<8x128xf32>
    %cst_11 = arith.constant dense<0.000000e+00> : vector<8x128xf32>
    %23 = tpu.matmul %22, %5, %cst_11 {dimension_numbers = #tpu.dot_dimension_numbers<[1], [0], [0], [1], [0, 0, 1, 1], [], []>} : vector<8x128xf32>, vector<128x128xf32>, vector<8x128xf32> -> vector<8x128xf32>
    %24 = vector.broadcast %6 : vector<1x128xf32> to vector<8x128xf32>
    %25 = arith.addf %23, %24 : vector<8x128xf32>
    %c0_12 = arith.constant 0 : index
    %c0_13 = arith.constant 0 : index
    %26 = vector.load %arg3[%c0_12, %c0_13] : memref<8x128xf32, #tpu.memory_space<vmem>>, vector<8x128xf32>
    tpu.vector_store %arg3[%c0_12, %c0_13], %25 {strides = array<i32>} : memref<8x128xf32, #tpu.memory_space<vmem>>, vector<8x128xf32>,
    return
  }
  func.func @transform_0(%arg0: i32) -> (i32, i32) {
    %c0_i32 = arith.constant 0 : i32
    %c0_i32_0 = arith.constant 0 : i32
    return %arg0, %c0_i32 : i32, i32
  }
  func.func @transform_1(%arg0: i32) -> (i32, i32) {
    %c0_i32 = arith.constant 0 : i32
    %c0_i32_0 = arith.constant 0 : i32
    %c0_i32_1 = arith.constant 0 : i32
    return %c0_i32, %c0_i32_0 : i32, i32
  }
  func.func @transform_2(%arg0: i32) -> (i32, i32) {
    %c0_i32 = arith.constant 0 : i32
    %c0_i32_0 = arith.constant 0 : i32
    return %arg0, %c0_i32 : i32, i32
  }
}

</mosaic_0001>

<llo_original>
// kernel: fcnn2_forward.1
$region0: #{fcnn2_forward.1}
  #allocation0 [shape = 'u32[]', space=smem, size = 0x4, offset = 0x4, fixed_abs, tag = 'smem constant byte address 0x4 - core index']
  #allocation1 [shape = 'u32[144,128]{1,0:T(1,128)}', space=vmem, size = 0x12000, scoped, tag = 'internal scratch']
  %s0 = inlined_call_operand.hbm [shape: f32[8,32], index: 0, kind: input, shape index: {}]
  %s1 = inlined_call_operand.hbm [shape: f32[312,128], index: 1, kind: input, shape index: {}]
  %s2 = inlined_call_operand.hbm [shape: f32[8,128], index: 2, kind: output, shape index: {}]
  %s3 = sld [smem:[#allocation0]]
  $region26: #{fcnn2_forward.1} parent=0
    _
  %s5 = ssub.s32 1, %s3
  %s6 = scalar_select 0, %s5, %s3
  $region1: #{fcnn2_forward.1} parent=0
    #allocation2 [shape = 'u8[4096]{0}', space=vmem, size = 0x1000, scoped, tag = 'input window, operand 0, single buffered']
    #allocation3 [shape = 's32[1]{0}', space=sflag, size = 0x4, scoped, tag = 'scoped memory for fcnn2_forward.1']
    #allocation4 [shape = 's32[1]{0}', space=sflag, size = 0x4, scoped, tag = 'scoped memory for fcnn2_forward.1']
    #allocation5 [shape = 'u8[159744]{0}', space=vmem, size = 0x27000, scoped, tag = 'input window, operand 1, single buffered']
    #allocation6 [shape = 's32[1]{0}', space=sflag, size = 0x4, scoped, tag = 'scoped memory for fcnn2_forward.1']
    #allocation7 [shape = 'u8[4096]{0}', space=vmem, size = 0x1000, scoped, tag = 'output window, operand 0, single buffered']
    %7 = vsyncpa [#allocation3], 0
    %8 = vsyncpa [#allocation6], 0
    %9 = vsyncpa [#allocation4], 0
    // Predicated region
    $region2: #{fcnn2_forward.1} parent=1 // pred_check
      _
    $region3: #{fcnn2_forward.1} parent=1 // pred_check_branch
      %11 = sbr.rel (0) target = $region5
    $region4: #{fcnn2_forward.1} parent=1 // pred_region
      %s13 = ssub.s32 128, 128
      %14 = vsyncadd [#allocation3], %s13
      %s16 = sshll.u32 [#allocation2], 4
      %s17 = int_to_ptr.vmem [resolvable:$true] %s16
      %19 = dma.hbm_to_vmem [thread:$0]  %s0, 128, %s17, [#allocation3]
    $region5: #{fcnn2_forward.1} parent=1 // pred_fallthru
      _
    // Predicated region
    $region6: #{fcnn2_forward.1} parent=1 // pred_check
      _
    $region7: #{fcnn2_forward.1} parent=1 // pred_check_branch
      %21 = sbr.rel (0) target = $region9
    $region8: #{fcnn2_forward.1} parent=1 // pred_region
      %s23 = ssub.s32 4992, 4992
      %24 = vsyncadd [#allocation6], %s23
      %s25 = sshll.u32 [#allocation5], 4
      %s26 = int_to_ptr.vmem [resolvable:$true] %s25
      %31 = dma.hbm_to_vmem [thread:$0]  %s1, 4992, %s26, [#allocation6], 128, 128, 8
    $region9: #{fcnn2_forward.1} parent=1 // pred_fallthru
      _
    // Predicated region
    $region10: #{fcnn2_forward.1} parent=1 // pred_check
      _
    $region11: #{fcnn2_forward.1} parent=1 // pred_check_branch
      %33 = sbr.rel (0) target = $region13
    $region12: #{fcnn2_forward.1} parent=1 // pred_region
      %34 = dma.done [#allocation3], 128
    $region13: #{fcnn2_forward.1} parent=1 // pred_fallthru
      _
    // Predicated region
    $region14: #{fcnn2_forward.1} parent=1 // pred_check
      _
    $region15: #{fcnn2_forward.1} parent=1 // pred_check_branch
      %36 = sbr.rel (0) target = $region17
    $region16: #{fcnn2_forward.1} parent=1 // pred_region
      %37 = dma.done [#allocation6], 4992
    $region17: #{fcnn2_forward.1} parent=1 // pred_fallthru
      _
    %v38 = vld [vmem:[#allocation2] sm:$0xff]
    %v39 = vld [vmem:[#allocation5] sm:$0xff]
    %v40 = vld [vmem:[#allocation5 + $0x8] sm:$0xff]
    %v41 = vld [vmem:[#allocation5 + $0x10] sm:$0xff]
    %v42 = vld [vmem:[#allocation5 + $0x18] sm:$0xff]
    %v43 = vld [vmem:[#allocation5 + $0x20] sm:$0x1]
    %v44 = vld [vmem:[#allocation5 + $0x28] sm:$0xff]
    %v45 = vld [vmem:[#allocation5 + $0x30] sm:$0xff]
    %v46 = vld [vmem:[#allocation5 + $0x38] sm:$0xff]
    %v47 = vld [vmem:[#allocation5 + $0x40] sm:$0xff]
    %v48 = vld [vmem:[#allocation5 + $0x48] sm:$0xff]
    %v49 = vld [vmem:[#allocation5 + $0x50] sm:$0xff]
    %v50 = vld [vmem:[#allocation5 + $0x58] sm:$0xff]
    %v51 = vld [vmem:[#allocation5 + $0x60] sm:$0xff]
    %v52 = vld [vmem:[#allocation5 + $0x68] sm:$0xff]
    %v53 = vld [vmem:[#allocation5 + $0x70] sm:$0xff]
    %v54 = vld [vmem:[#allocation5 + $0x78] sm:$0xff]
    %v55 = vld [vmem:[#allocation5 + $0x80] sm:$0xff]
    %v56 = vld [vmem:[#allocation5 + $0x88] sm:$0xff]
    %v57 = vld [vmem:[#allocation5 + $0x90] sm:$0xff]
    %v58 = vld [vmem:[#allocation5 + $0x98] sm:$0xff]
    %v59 = vld [vmem:[#allocation5 + $0xa0] sm:$0xff]
    %v60 = vld [vmem:[#allocation5 + $0xa8] sm:$0x1]
    %v61 = vld [vmem:[#allocation5 + $0xb0] sm:$0xff]
    %v62 = vld [vmem:[#allocation5 + $0xb8] sm:$0xff]
    %v63 = vld [vmem:[#allocation5 + $0xc0] sm:$0xff]
    %v64 = vld [vmem:[#allocation5 + $0xc8] sm:$0xff]
    %v65 = vld [vmem:[#allocation5 + $0xd0] sm:$0xff]
    %v66 = vld [vmem:[#allocation5 + $0xd8] sm:$0xff]
    %v67 = vld [vmem:[#allocation5 + $0xe0] sm:$0xff]
    %v68 = vld [vmem:[#allocation5 + $0xe8] sm:$0xff]
    %v69 = vld [vmem:[#allocation5 + $0xf0] sm:$0xff]
    %v70 = vld [vmem:[#allocation5 + $0xf8] sm:$0xff]
    %v71 = vld [vmem:[#allocation5 + $0x100] sm:$0xff]
    %v72 = vld [vmem:[#allocation5 + $0x108] sm:$0xff]
    %v73 = vld [vmem:[#allocation5 + $0x110] sm:$0xff]
    %v74 = vld [vmem:[#allocation5 + $0x118] sm:$0xff]
    %v75 = vld [vmem:[#allocation5 + $0x120] sm:$0xff]
    %v76 = vld [vmem:[#allocation5 + $0x128] sm:$0xff]
    %v77 = vld [vmem:[#allocation5 + $0x130] sm:$0x1]
    %v78 = vlaneseq
    %v79 = vshrl.u32 %v78, 7
    %v80 = vsub.s32 0, %v79
    %v81 = vrot.slane %v43, %v80
    %vm82 = vcmask 261120
    %v84 = vsel %vm82, %v38, 0
    %86 = vmatprep.subr.mxu0 0.0
    %87 = vmatpush1.msra.mxu0 0.0
    %88 = vmatprep.subr.mxu0 0.0
    %89 = vmatpush1.msra.mxu0 0.0
    %90 = vmatprep.subr.mxu0 0.0
    %91 = vmatpush1.msra.mxu0 0.0
    %92 = vmatprep.subr.mxu0 0.0
    %93 = vmatpush1.msra.mxu0 0.0
    %94 = vmatprep.subr.mxu0 0.0
    %95 = vmatpush1.msra.mxu0 0.0
    %96 = vmatprep.subr.mxu0 0.0
    %97 = vmatpush1.msra.mxu0 0.0
    %98 = vmatprep.subr.mxu0 0.0
    %99 = vmatpush1.msra.mxu0 0.0
    %100 = vmatprep.subr.mxu0 0.0
    %101 = vmatpush1.msra.mxu0 0.0
    %102 = vmatprep.subr.mxu0 0.0
    %103 = vmatpush1.msra.mxu0 0.0
    %104 = vmatprep.subr.mxu0 0.0
    %105 = vmatpush1.msra.mxu0 0.0
    %106 = vmatprep.subr.mxu0 0.0
    %107 = vmatpush1.msra.mxu0 0.0
    %108 = vmatprep.subr.mxu0 0.0
    %109 = vmatpush1.msra.mxu0 0.0
    %110 = vmatprep.subr.mxu0 0.0
    %111 = vmatpush1.msra.mxu0 %v42
    %112 = vmatprep.subr.mxu0 0.0
    %113 = vmatpush1.msra.mxu0 %v41
    %114 = vmatprep.subr.mxu0 0.0
    %115 = vmatpush1.msra.mxu0 %v40
    %116 = vmatprep.subr.mxu0 0.0
    %117 = vmatpush1.msra.mxu0 %v39
    %118 = vmatprep.subr.mxu0 0.0
    %119 = vmatpush2.msra.mxu0 0.0
    %120 = vmatprep.subr.mxu0 0.0
    %121 = vmatpush2.msra.mxu0 0.0
    %122 = vmatprep.subr.mxu0 0.0
    %123 = vmatpush2.msra.mxu0 0.0
    %124 = vmatprep.subr.mxu0 0.0
    %125 = vmatpush2.msra.mxu0 0.0
    %126 = vmatprep.subr.mxu0 0.0
    %127 = vmatpush2.msra.mxu0 0.0
    %128 = vmatprep.subr.mxu0 0.0
    %129 = vmatpush2.msra.mxu0 0.0
    %130 = vmatprep.subr.mxu0 0.0
    %131 = vmatpush2.msra.mxu0 0.0
    %132 = vmatprep.subr.mxu0 0.0
    %133 = vmatpush2.msra.mxu0 0.0
    %134 = vmatprep.subr.mxu0 0.0
    %135 = vmatpush2.msra.mxu0 0.0
    %136 = vmatprep.subr.mxu0 0.0
    %137 = vmatpush2.msra.mxu0 0.0
    %138 = vmatprep.subr.mxu0 0.0
    %139 = vmatpush2.msra.mxu0 0.0
    %140 = vmatprep.subr.mxu0 0.0
    %141 = vmatpush2.msra.mxu0 0.0
    %142 = vmatprep.subr.mxu0 0.0
    %143 = vmatpush2.msra.mxu0 0.0
    %144 = vmatprep.subr.mxu0 0.0
    %145 = vmatpush2.msra.mxu0 0.0
    %146 = vmatprep.subr.mxu0 0.0
    %147 = vmatpush2.msra.mxu0 0.0
    %148 = vmatprep.subr.mxu0 0.0
    %149 = vmatpush2.msra.mxu0 0.0
    %150 = vmatprep.mubr.f32.mxu0 0.0
    %151 = vmatmul.mubr.f32.gmra.mxu0 %v84
    %v152 = vpop.f32.mrf.mxu0
    %v153 = vadd.f32 %v81, %v152
    %v154 = vpop.f32.mrf.mxu0
    %155 = vdwg.mxu0
    %v156 = vxor.u32 %v153, 2147483648
    %v157 = vmul.f32 %v156, 1.442695
    %v158 = vpow.pop %v157
    %v159 = vadd.f32 %v158, 1.0
    %v160 = vrcp.pop %v159
    %v161 = vmul.f32 1.0, %v160
    %v162 = vlaneseq
    %v163 = vshrl.u32 %v162, 7
    %v164 = vsub.s32 0, %v163
    %v165 = vrot.slane %v60, %v164
    %166 = vmatprep.subr.mxu0 0.0
    %167 = vmatpush1.msra.mxu0 %v59
    %168 = vmatprep.subr.mxu0 0.0
    %169 = vmatpush1.msra.mxu0 %v58
    %170 = vmatprep.subr.mxu0 0.0
    %171 = vmatpush1.msra.mxu0 %v57
    %172 = vmatprep.subr.mxu0 0.0
    %173 = vmatpush1.msra.mxu0 %v56
    %174 = vmatprep.subr.mxu0 0.0
    %175 = vmatpush1.msra.mxu0 %v55
    %176 = vmatprep.subr.mxu0 0.0
    %177 = vmatpush1.msra.mxu0 %v54
    %178 = vmatprep.subr.mxu0 0.0
    %179 = vmatpush1.msra.mxu0 %v53
    %180 = vmatprep.subr.mxu0 0.0
    %181 = vmatpush1.msra.mxu0 %v52
    %182 = vmatprep.subr.mxu0 0.0
    %183 = vmatpush1.msra.mxu0 %v51
    %184 = vmatprep.subr.mxu0 0.0
    %185 = vmatpush1.msra.mxu0 %v50
    %186 = vmatprep.subr.mxu0 0.0
    %187 = vmatpush1.msra.mxu0 %v49
    %188 = vmatprep.subr.mxu0 0.0
    %189 = vmatpush1.msra.mxu0 %v48
    %190 = vmatprep.subr.mxu0 0.0
    %191 = vmatpush1.msra.mxu0 %v47
    %192 = vmatprep.subr.mxu0 0.0
    %193 = vmatpush1.msra.mxu0 %v46
    %194 = vmatprep.subr.mxu0 0.0
    %195 = vmatpush1.msra.mxu0 %v45
    %196 = vmatprep.subr.mxu0 0.0
    %197 = vmatpush1.msra.mxu0 %v44
    %198 = vmatprep.subr.mxu0 0.0
    %199 = vmatpush2.msra.mxu0 0.0
    %200 = vmatprep.subr.mxu0 0.0
    %201 = vmatpush2.msra.mxu0 0.0
    %202 = vmatprep.subr.mxu0 0.0
    %203 = vmatpush2.msra.mxu0 0.0
    %204 = vmatprep.subr.mxu0 0.0
    %205 = vmatpush2.msra.mxu0 0.0
    %206 = vmatprep.subr.mxu0 0.0
    %207 = vmatpush2.msra.mxu0 0.0
    %208 = vmatprep.subr.mxu0 0.0
    %209 = vmatpush2.msra.mxu0 0.0
    %210 = vmatprep.subr.mxu0 0.0
    %211 = vmatpush2.msra.mxu0 0.0
    %212 = vmatprep.subr.mxu0 0.0
    %213 = vmatpush2.msra.mxu0 0.0
    %214 = vmatprep.subr.mxu0 0.0
    %215 = vmatpush2.msra.mxu0 0.0
    %216 = vmatprep.subr.mxu0 0.0
    %217 = vmatpush2.msra.mxu0 0.0
    %218 = vmatprep.subr.mxu0 0.0
    %219 = vmatpush2.msra.mxu0 0.0
    %220 = vmatprep.subr.mxu0 0.0
    %221 = vmatpush2.msra.mxu0 0.0
    %222 = vmatprep.subr.mxu0 0.0
    %223 = vmatpush2.msra.mxu0 0.0
    %224 = vmatprep.subr.mxu0 0.0
    %225 = vmatpush2.msra.mxu0 0.0
    %226 = vmatprep.subr.mxu0 0.0
    %227 = vmatpush2.msra.mxu0 0.0
    %228 = vmatprep.subr.mxu0 0.0
    %229 = vmatpush2.msra.mxu0 0.0
    %230 = vmatprep.mubr.f32.mxu0 0.0
    %231 = vmatmul.mubr.f32.gmra.mxu0 %v161
    %v232 = vpop.f32.mrf.mxu0
    %v233 = vadd.f32 %v165, %v232
    %v234 = vpop.f32.mrf.mxu0
    %235 = vdwg.mxu0
    %v236 = vxor.u32 %v233, 2147483648
    %v237 = vmul.f32 %v236, 1.442695
    %v238 = vpow.pop %v237
    %v239 = vadd.f32 %v238, 1.0
    %v240 = vrcp.pop %v239
    %v241 = vmul.f32 1.0, %v240
    %v242 = vlaneseq
    %v243 = vshrl.u32 %v242, 7
    %v244 = vsub.s32 0, %v243
    %v245 = vrot.slane %v77, %v244
    %246 = vmatprep.subr.mxu0 0.0
    %247 = vmatpush1.msra.mxu0 %v76
    %248 = vmatprep.subr.mxu0 0.0
    %249 = vmatpush1.msra.mxu0 %v75
    %250 = vmatprep.subr.mxu0 0.0
    %251 = vmatpush1.msra.mxu0 %v74
    %252 = vmatprep.subr.mxu0 0.0
    %253 = vmatpush1.msra.mxu0 %v73
    %254 = vmatprep.subr.mxu0 0.0
    %255 = vmatpush1.msra.mxu0 %v72
    %256 = vmatprep.subr.mxu0 0.0
    %257 = vmatpush1.msra.mxu0 %v71
    %258 = vmatprep.subr.mxu0 0.0
    %259 = vmatpush1.msra.mxu0 %v70
    %260 = vmatprep.subr.mxu0 0.0
    %261 = vmatpush1.msra.mxu0 %v69
    %262 = vmatprep.subr.mxu0 0.0
    %263 = vmatpush1.msra.mxu0 %v68
    %264 = vmatprep.subr.mxu0 0.0
    %265 = vmatpush1.msra.mxu0 %v67
    %266 = vmatprep.subr.mxu0 0.0
    %267 = vmatpush1.msra.mxu0 %v66
    %268 = vmatprep.subr.mxu0 0.0
    %269 = vmatpush1.msra.mxu0 %v65
    %270 = vmatprep.subr.mxu0 0.0
    %271 = vmatpush1.msra.mxu0 %v64
    %272 = vmatprep.subr.mxu0 0.0
    %273 = vmatpush1.msra.mxu0 %v63
    %274 = vmatprep.subr.mxu0 0.0
    %275 = vmatpush1.msra.mxu0 %v62
    %276 = vmatprep.subr.mxu0 0.0
    %277 = vmatpush1.msra.mxu0 %v61
    %278 = vmatprep.subr.mxu0 0.0
    %279 = vmatpush2.msra.mxu0 0.0
    %280 = vmatprep.subr.mxu0 0.0
    %281 = vmatpush2.msra.mxu0 0.0
    %282 = vmatprep.subr.mxu0 0.0
    %283 = vmatpush2.msra.mxu0 0.0
    %284 = vmatprep.subr.mxu0 0.0
    %285 = vmatpush2.msra.mxu0 0.0
    %286 = vmatprep.subr.mxu0 0.0
    %287 = vmatpush2.msra.mxu0 0.0
    %288 = vmatprep.subr.mxu0 0.0
    %289 = vmatpush2.msra.mxu0 0.0
    %290 = vmatprep.subr.mxu0 0.0
    %291 = vmatpush2.msra.mxu0 0.0
    %292 = vmatprep.subr.mxu0 0.0
    %293 = vmatpush2.msra.mxu0 0.0
    %294 = vmatprep.subr.mxu0 0.0
    %295 = vmatpush2.msra.mxu0 0.0
    %296 = vmatprep.subr.mxu0 0.0
    %297 = vmatpush2.msra.mxu0 0.0
    %298 = vmatprep.subr.mxu0 0.0
    %299 = vmatpush2.msra.mxu0 0.0
    %300 = vmatprep.subr.mxu0 0.0
    %301 = vmatpush2.msra.mxu0 0.0
    %302 = vmatprep.subr.mxu0 0.0
    %303 = vmatpush2.msra.mxu0 0.0
    %304 = vmatprep.subr.mxu0 0.0
    %305 = vmatpush2.msra.mxu0 0.0
    %306 = vmatprep.subr.mxu0 0.0
    %307 = vmatpush2.msra.mxu0 0.0
    %308 = vmatprep.subr.mxu0 0.0
    %309 = vmatpush2.msra.mxu0 0.0
    %310 = vmatprep.mubr.f32.mxu0 0.0
    %311 = vmatmul.mubr.f32.gmra.mxu0 %v241
    %v312 = vpop.f32.mrf.mxu0
    %v313 = vadd.f32 %v245, %v312
    %v314 = vpop.f32.mrf.mxu0
    %315 = vdwg.mxu0
    %316 = vst [vmem:[#allocation7] sm:$0xff] %v313
    // Predicated region
    $region18: #{fcnn2_forward.1} parent=1 // pred_check
      _
    $region19: #{fcnn2_forward.1} parent=1 // pred_check_branch
      %318 = sbr.rel (0) target = $region21
    $region20: #{fcnn2_forward.1} parent=1 // pred_region
      %s320 = ssub.s32 128, 128
      %321 = vsyncadd [#allocation4], %s320
      %s323 = sshll.u32 [#allocation7], 4
      %s324 = int_to_ptr.vmem [resolvable:$true] %s323
      %326 = dma.vmem_to_hbm [thread:$0]  %s324, 128, %s2, [#allocation4]
    $region21: #{fcnn2_forward.1} parent=1 // pred_fallthru
      _
    // Predicated region
    $region22: #{fcnn2_forward.1} parent=1 // pred_check
      _
    $region23: #{fcnn2_forward.1} parent=1 // pred_check_branch
      %328 = sbr.rel (0) target = $region25
    $region24: #{fcnn2_forward.1} parent=1 // pred_region
      %329 = dma.done [#allocation4], 128
    $region25: #{fcnn2_forward.1} parent=1 // pred_fallthru
      _
    %330 = vsyncpa [#allocation3], 1
    %331 = vsyncpa [#allocation6], 1
    %332 = vsyncpa [#allocation4], 1

</llo_original>
